<compile_context>
chip_gen: v7x
topology: tpu7x:2x2x1
jax: 0.10.0
libtpu: 0.0.40
codegen_flags: <defaults>
</compile_context>

<pallas_src>
import functools
import math

import jax
import jax.numpy as jnp
from jax.experimental import pallas as pl
from jax.experimental.pallas import tpu as pltpu

LANES = 128           # TPU lane width -> lane-dense last block dim
MAX_TILE_ROWS = 1024  # 1024 x 128 f32 = 0.5 MiB per block buffer


def build_pe_table(max_seq_len: int, embedding_dim: int) -> jnp.ndarray:
    """Vectorized pe buffer, identical to the PyTorch __init__ double loop.

    The module sets pe[pos, i] = sin(pos / 10000**(2*i/d)) and
    pe[pos, i+1] = cos(pos / 10000**(2*(i+1)/d)); i.e. every column j uses
    the exponent 2*j/d, sin on even columns, cos on odd columns.
    """
    pos = jnp.arange(max_seq_len, dtype=jnp.float32)[:, None]          # (S, 1)
    col_f = jnp.arange(embedding_dim, dtype=jnp.float32)[None, :]      # (1, D)
    div = jnp.power(jnp.float32(10000.0), 2.0 * col_f / embedding_dim)
    angle = pos / div
    even = (jnp.arange(embedding_dim)[None, :] % 2) == 0
    pe = jnp.where(even, jnp.sin(angle), jnp.cos(angle))
    return pe[None, :, :].astype(jnp.float32)            # (1, max_seq_len, D)


def _pos_enc_kernel(tok_ref, pe_ref, o_ref, *, scale):
    # out = token * sqrt(D) + pe   (elementwise; VPU only, HBM-bound)
    o_ref[...] = tok_ref[...] * scale + pe_ref[...]


def _round_up(x: int, m: int) -> int:
    return (x + m - 1) // m * m


def positional_encoding(token: jnp.ndarray, pe: jnp.ndarray) -> jnp.ndarray:
    """token: (B, S, D) float32; pe: (1, max_seq_len, D) float32."""
    B, S, D = token.shape
    scale = math.sqrt(D)
    pe_slice = pe[:, :S, :]                              # (1, S, D)

    # ---- layout plumbing: lane-dense (rows, 128) slab per batch element ----
    N = S * D
    rows = pl.cdiv(N, LANES)
    tile_rows = min(MAX_TILE_ROWS, _round_up(rows, 8))   # multiple of 8
    rows_pad = _round_up(rows, tile_rows)
    n_pad = rows_pad * LANES

    tok_flat = token.reshape(B, N)
    pe_flat = pe_slice.reshape(1, N)
    if n_pad != N:                                       # ragged edge -> pad
        tok_flat = jnp.pad(tok_flat, ((0, 0), (0, n_pad - N)))
        pe_flat = jnp.pad(pe_flat, ((0, 0), (0, n_pad - N)))
    tok3 = tok_flat.reshape(B, rows_pad, LANES)
    pe3 = pe_flat.reshape(1, rows_pad, LANES)

    # Row tiles outer, batch inner: pe block index is constant across the
    # inner batch axis, so Pallas skips re-DMAing pe for consecutive steps.
    grid = (rows_pad // tile_rows, B)

    out = pl.pallas_call(
        functools.partial(_pos_enc_kernel, scale=scale),
        out_shape=jax.ShapeDtypeStruct((B, rows_pad, LANES), token.dtype),
        grid=grid,
        in_specs=[
            pl.BlockSpec((1, tile_rows, LANES), lambda r, b: (b, r, 0)),  # token
            pl.BlockSpec((1, tile_rows, LANES), lambda r, b: (0, r, 0)),  # pe (batch-resident)
        ],
        out_specs=pl.BlockSpec((1, tile_rows, LANES), lambda r, b: (b, r, 0)),
        compiler_params=pltpu.CompilerParams(
            dimension_semantics=("arbitrary", "parallel")),  # batch axis -> v7x megacore
    )(tok3, pe3)

    return out.reshape(B, n_pad)[:, :N].reshape(B, S, D)


if __name__ == "__main__":
    batch, seq_len, embedding_dim, max_seq_len = 2, 8, 32, 16

    key = jax.random.PRNGKey(0)
    token = jax.random.normal(key, (batch, seq_len, embedding_dim),
                              dtype=jnp.float32)

    pe = build_pe_table(max_seq_len, embedding_dim)

    # Sanity: vectorized pe table matches the PyTorch double-loop definition.
    pe_host = jax.device_get(pe)
    for pos in range(max_seq_len):
        for i in range(0, embedding_dim, 2):
            assert abs(float(pe_host[0, pos, i]) -
                       math.sin(pos / 10000 ** (2 * i / embedding_dim))) < 1e-4
            assert abs(float(pe_host[0, pos, i + 1]) -
                       math.cos(pos / 10000 ** (2 * (i + 1) / embedding_dim))) < 1e-4

    out = jax.jit(positional_encoding)(token, pe)
    out = jax.block_until_ready(out)

    # Reference check in plain JAX (same math as the module's forward).
    ref = token * math.sqrt(embedding_dim) + pe[:, :seq_len]
    assert out.shape == (batch, seq_len, embedding_dim)
    assert jnp.allclose(out, ref, atol=1e-5, rtol=1e-5)

    print("KERNEL_OK")
</pallas_src>

<mosaic_0001>
module attributes {stable_mosaic.version = 11 : i64} {
  func.func @_pos_enc_kernel(%arg0: i32, %arg1: i32, %arg2: memref<1x8x128xf32, #tpu.memory_space<vmem>>, %arg3: memref<1x8x128xf32, #tpu.memory_space<vmem>>, %arg4: memref<1x8x128xf32, #tpu.memory_space<vmem>>) attributes {dimension_semantics = [#tpu.dimension_semantics<arbitrary>, #tpu.dimension_semantics<parallel>], iteration_bounds = array<i64: 1, 2>, scalar_prefetch = 0 : i64, scratch_operands = 0 : i64, tpu.core_type = #tpu.core_type<tc>, window_params = [{transform_indices = @transform_0, window_bounds = array<i64: 1, 8, 128>}, {transform_indices = @transform_1, window_bounds = array<i64: 1, 8, 128>}, {transform_indices = @transform_2, window_bounds = array<i64: 1, 8, 128>}]} {
    %c0 = arith.constant 0 : index
    %c0_0 = arith.constant 0 : index
    %c0_1 = arith.constant 0 : index
    %0 = vector.load %arg2[%c0, %c0_0, %c0_1] : memref<1x8x128xf32, #tpu.memory_space<vmem>>, vector<1x8x128xf32>
    %cst = arith.constant 5.65685415 : f32
    %1 = vector.broadcast %cst : f32 to vector<1x8x128xf32>
    %2 = arith.mulf %0, %1 : vector<1x8x128xf32>
    %c0_2 = arith.constant 0 : index
    %c0_3 = arith.constant 0 : index
    %c0_4 = arith.constant 0 : index
    %3 = vector.load %arg3[%c0_2, %c0_3, %c0_4] : memref<1x8x128xf32, #tpu.memory_space<vmem>>, vector<1x8x128xf32>
    %4 = arith.addf %2, %3 : vector<1x8x128xf32>
    %c0_5 = arith.constant 0 : index
    %c0_6 = arith.constant 0 : index
    %c0_7 = arith.constant 0 : index
    %5 = vector.load %arg4[%c0_5, %c0_6, %c0_7] : memref<1x8x128xf32, #tpu.memory_space<vmem>>, vector<1x8x128xf32>
    tpu.vector_store %arg4[%c0_5, %c0_6, %c0_7], %4 {strides = array<i32>} : memref<1x8x128xf32, #tpu.memory_space<vmem>>, vector<1x8x128xf32>,
    return
  }
  func.func @transform_0(%arg0: i32, %arg1: i32) -> (i32, i32, i32) {
    %c0_i32 = arith.constant 0 : i32
    %c0_i32_0 = arith.constant 0 : i32
    return %arg1, %arg0, %c0_i32 : i32, i32, i32
  }
  func.func @transform_1(%arg0: i32, %arg1: i32) -> (i32, i32, i32) {
    %c0_i32 = arith.constant 0 : i32
    %c0_i32_0 = arith.constant 0 : i32
    %c0_i32_1 = arith.constant 0 : i32
    return %c0_i32, %arg0, %c0_i32_0 : i32, i32, i32
  }
  func.func @transform_2(%arg0: i32, %arg1: i32) -> (i32, i32, i32) {
    %c0_i32 = arith.constant 0 : i32
    %c0_i32_0 = arith.constant 0 : i32
    return %arg1, %arg0, %c0_i32 : i32, i32, i32
  }
}

</mosaic_0001>

<llo_original>
// kernel: positional_encoding.1
$region0: #{positional_encoding.1}
  #allocation0 [shape = 'u32[]', space=smem, size = 0x4, offset = 0x4, fixed_abs, tag = 'smem constant byte address 0x4 - core index']
  #allocation1 [shape = 'u32[144,128]{1,0:T(1,128)}', space=vmem, size = 0x12000, scoped, tag = 'internal scratch']
  %s0 = inlined_call_operand.vmem [shape: f32[2,8,128], index: 0, kind: input, shape index: {}]
  %s1 = inlined_call_operand.vmem [shape: f32[1,8,128], index: 1, kind: input, shape index: {}]
  %s2 = inlined_call_operand.vmem [shape: f32[2,8,128], index: 2, kind: output, shape index: {}]
  %s3 = sld [smem:[#allocation0]]
  $region41: #{positional_encoding.1} parent=0
    _
  %s5 = ssub.s32 1, %s3
  %s6 = scalar_select 0, %s5, %s3
  loop: start=0, step=1, limit=4
  $region2: #{positional_encoding.1} parent=0 // loop_pre_header
    _
  $region3: #{positional_encoding.1} parent=0 // loop_header
    %s8 = sphi 0, %s12
    %p9 = scmp.ge.s32.totalorder %s8, 4
    %s15 = sphi 0, %s27
    %s16 = sphi 0, %s23
    %s17 = sphi 0, %s15
    %s18 = sphi 0, %s16
    %s19 = sphi 0, %s17
    %s20 = sphi 0, %s18
    %s32 = sphi 0, %s34
    %s35 = sphi 0, %s32
    %s36 = sphi 0, %s35
    %s52 = sphi 0, %s36
    %s58 = sphi 0, %s60
    %s61 = sphi 0, %s58
    %s62 = sphi 0, %s61
    %s78 = sphi 0, %s62
    %s86 = sphi 0, %s88
    %s89 = sphi 0, %s86
    %s90 = sphi 0, %s89
    %s106 = sphi 0, %s90
  $region4: #{positional_encoding.1} parent=0 // loop_header_branch
    %11 = sbr.rel (%p9) target = $region8
  $region5: #{positional_encoding.1} parent=0 // loop_body
    %s13 = ssub.s32 %s8, 1
    %s14 = ssub.s32 %s8, 2
    %s21 = sadd.s32 1, %s16
    %p22 = scmp.ge.s32.totalorder %s21, 2
    %s23 = scalar_select %p22, 0, %s21
    %s24 = sadd.s32 1, %s15
    %s25 = scalar_select %p22, %s24, %s15
    %p26 = scmp.ge.s32.totalorder %s25, 1
    %s27 = scalar_select %p26, 0, %s25
    %s28 = ssub.s32 %s16, %s23
    %s29 = ssub.s32 %s15, %s27
    %s30 = sor.u32 %s28, %s29
    %p31 = scmp.eq.s32.totalorder %s30, 0
    %s33 = sadd.s32 %s32, 1
    %s34 = scalar_select %p31, %s32, %s33
    %p37 = pneg %p31
    %p38 = scmp.eq.s32.totalorder %s8, 1
    %p39 = por %p37, %p38
    %p40 = scmp.ne.s32.totalorder %s32, %s35
    %p41 = scmp.eq.s32.totalorder %s8, 0
    %p42 = por %p40, %p41
    %p43 = scmp.ne.s32.totalorder %s32, %s35
    %p44 = scmp.eq.s32.totalorder %s13, 1
    %p45 = por %p43, %p44
    %p46 = scmp.ne.s32.totalorder %s35, %s36
    %p47 = scmp.eq.s32.totalorder %s13, 0
    %p48 = por %p46, %p47
    %p49 = scmp.ne.s32.totalorder %s35, %s36
    %p50 = scmp.eq.s32.totalorder %s14, 1
    %p51 = por %p49, %p50
    %p53 = scmp.ne.s32.totalorder %s36, %s52
    %p54 = scmp.eq.s32.totalorder %s14, 0
    %p55 = por %p53, %p54
    %s56 = ssub.s32 %s15, %s27
    %p57 = scmp.eq.s32.totalorder %s56, 0
    %s59 = sadd.s32 %s58, 1
    %s60 = scalar_select %p57, %s58, %s59
    %p63 = pneg %p57
    %p64 = scmp.eq.s32.totalorder %s8, 1
    %p65 = por %p63, %p64
    %p66 = scmp.ne.s32.totalorder %s58, %s61
    %p67 = scmp.eq.s32.totalorder %s8, 0
    %p68 = por %p66, %p67
    %p69 = scmp.ne.s32.totalorder %s58, %s61
    %p70 = scmp.eq.s32.totalorder %s13, 1
    %p71 = por %p69, %p70
    %p72 = scmp.ne.s32.totalorder %s61, %s62
    %p73 = scmp.eq.s32.totalorder %s13, 0
    %p74 = por %p72, %p73
    %p75 = scmp.ne.s32.totalorder %s61, %s62
    %p76 = scmp.eq.s32.totalorder %s14, 1
    %p77 = por %p75, %p76
    %p79 = scmp.ne.s32.totalorder %s62, %s78
    %p80 = scmp.eq.s32.totalorder %s14, 0
    %p81 = por %p79, %p80
    %s82 = ssub.s32 %s16, %s23
    %s83 = ssub.s32 %s15, %s27
    %s84 = sor.u32 %s82, %s83
    %p85 = scmp.eq.s32.totalorder %s84, 0
    %s87 = sadd.s32 %s86, 1
    %s88 = scalar_select %p85, %s86, %s87
    %p91 = pneg %p85
    %p92 = scmp.eq.s32.totalorder %s8, 1
    %p93 = por %p91, %p92
    %p94 = scmp.ne.s32.totalorder %s86, %s89
    %p95 = scmp.eq.s32.totalorder %s8, 0
    %p96 = por %p94, %p95
    %p97 = scmp.ne.s32.totalorder %s86, %s89
    %p98 = scmp.eq.s32.totalorder %s13, 1
    %p99 = por %p97, %p98
    %p100 = scmp.ne.s32.totalorder %s89, %s90
    %p101 = scmp.eq.s32.totalorder %s13, 0
    %p102 = por %p100, %p101
    %p103 = scmp.ne.s32.totalorder %s89, %s90
    %p104 = scmp.eq.s32.totalorder %s14, 1
    %p105 = por %p103, %p104
    %p107 = scmp.ne.s32.totalorder %s90, %s106
    %p108 = scmp.eq.s32.totalorder %s14, 0
    %p109 = por %p107, %p108
    %p110 = scmp.le.s32.totalorder 1, %s8
    %p111 = scmp.lt.s32.totalorder %s8, 3
    %p112 = pnand %p110, %p111
    %p113 = pneg %p112
    // Predicated region
    $region9: #{positional_encoding.1} parent=5 // pred_check
      _
    $region10: #{positional_encoding.1} parent=5 // pred_check_branch
      %115 = sbr.rel (%p112) target = $region12
    $region11: #{positional_encoding.1} parent=5 // pred_region
      %s116 = ssub.s32 %s8, 1
      // Predicated region
      $region13: #{positional_encoding.1} parent=11 // pred_check
        %p117 = pneg %p74
      $region14: #{positional_encoding.1} parent=11 // pred_check_branch
        %119 = sbr.rel (%p117) target = $region16
      $region15: #{positional_encoding.1} parent=11 // pred_region
        %p120 = scmp.lt.s32.totalorder %s17, 0
        %s121 = scalar_select %p120, %s17, 0
        %s122 = smul.addr %s121, 8
        %s123 = scalar_lea.vmem %s1, %s122
      $region16: #{positional_encoding.1} parent=11 // pred_fallthru
        _
    $region12: #{positional_encoding.1} parent=5 // pred_fallthru
      _
    %p124 = scmp.lt.s32.totalorder %s8, 2
    // Predicated region
    $region17: #{positional_encoding.1} parent=5 // pred_check
      %p125 = pneg %p124
    $region18: #{positional_encoding.1} parent=5 // pred_check_branch
      %127 = sbr.rel (%p125) target = $region20
    $region19: #{positional_encoding.1} parent=5 // pred_region
      // Predicated region
      $region21: #{positional_encoding.1} parent=19 // pred_check
        %p128 = pneg %p42
      $region22: #{positional_encoding.1} parent=19 // pred_check_branch
        %130 = sbr.rel (%p128) target = $region24
      $region23: #{positional_encoding.1} parent=19 // pred_region
        %p131 = scmp.lt.s32.totalorder %s16, 1
        %s132 = scalar_select %p131, %s16, 1
        %p133 = scmp.lt.s32.totalorder %s15, 0
        %s134 = scalar_select %p133, %s15, 0
        %s135 = sadd.s32 %s134, %s132
        %s136 = smul.addr %s135, 8
        %s137 = scalar_lea.vmem %s0, %s136
      $region24: #{positional_encoding.1} parent=19 // pred_fallthru
        _
    $region20: #{positional_encoding.1} parent=5 // pred_fallthru
      _
    %p138 = scmp.le.s32.totalorder 1, %s8
    %p139 = scmp.lt.s32.totalorder %s8, 3
    %p140 = pnand %p138, %p139
    %p141 = pneg %p140
    // Predicated region
    $region25: #{positional_encoding.1} parent=5 // pred_check
      _
    $region26: #{positional_encoding.1} parent=5 // pred_check_branch
      %143 = sbr.rel (%p140) target = $region28
    $region27: #{positional_encoding.1} parent=5 // pred_region
      %s144 = ssub.s32 %s8, 1
      %p145 = scmp.lt.s32.totalorder %s18, 1
      %s146 = scalar_select %p145, %s18, 1
      %p147 = scmp.lt.s32.totalorder %s17, 0
      %s148 = scalar_select %p147, %s17, 0
      %s149 = sadd.s32 %s148, %s146
      %s150 = smul.addr %s149, 8
      %s151 = scalar_lea.vmem %s0, %s150
      %p152 = pneg %p48
      %p153 = pneg %p45
      %p154 = scmp.lt.s32.totalorder %s17, 0
      %s155 = scalar_select %p154, %s17, 0
      %s156 = smul.addr %s155, 8
      %s157 = scalar_lea.vmem %s1, %s156
      %p158 = pneg %p74
      %p159 = pneg %p71
      %p160 = pneg %p102
      %p161 = pneg %p99
      %p162 = scmp.lt.s32.totalorder %s18, 1
      %s163 = scalar_select %p162, %s18, 1
      %p164 = scmp.lt.s32.totalorder %s17, 0
      %s165 = scalar_select %p164, %s17, 0
      %s166 = sadd.s32 %s165, %s163
      %s167 = smul.addr %s166, 8
      %s168 = scalar_lea.vmem %s2, %s167
      %p169 = scmp.lt.s32.totalorder %s18, 1
      %s170 = scalar_select %p169, %s18, 1
      %p171 = scmp.lt.s32.totalorder %s17, 0
      %s172 = scalar_select %p171, %s17, 0
      %s173 = sadd.s32 %s172, %s170
      %s174 = smul.addr %s173, 8
      %s175 = scalar_lea.vmem %s0, %s174
      %p176 = scmp.lt.s32.totalorder %s17, 0
      %s177 = scalar_select %p176, %s17, 0
      %s178 = smul.addr %s177, 8
      %s179 = scalar_lea.vmem %s1, %s178
      %p180 = scmp.lt.s32.totalorder %s18, 1
      %s181 = scalar_select %p180, %s18, 1
      %p182 = scmp.lt.s32.totalorder %s17, 0
      %s183 = scalar_select %p182, %s17, 0
      %s184 = sadd.s32 %s183, %s181
      %s185 = smul.addr %s184, 8
      %s186 = scalar_lea.vmem %s2, %s185
      %v187 = vld [vmem:[%s175] sm:$0xff]
      %v188 = vmul.f32 %v187, 5.656854
      %v189 = vld [vmem:[%s179] sm:$0xff]
      %v190 = vadd.f32 %v188, %v189
      %191 = vst [vmem:[%s186] sm:$0xff] %v190
      %p192 = scmp.lt.s32.totalorder %s18, 1
      %s193 = scalar_select %p192, %s18, 1
      %p194 = scmp.lt.s32.totalorder %s17, 0
      %s195 = scalar_select %p194, %s17, 0
      %s196 = sadd.s32 %s195, %s193
      %s197 = smul.addr %s196, 8
      %s198 = scalar_lea.vmem %s2, %s197
      // Predicated region
      $region29: #{positional_encoding.1} parent=27 // pred_check
        %p199 = pneg %p99
      $region30: #{positional_encoding.1} parent=27 // pred_check_branch
        %201 = sbr.rel (%p199) target = $region32
      $region31: #{positional_encoding.1} parent=27 // pred_region
        _
      $region32: #{positional_encoding.1} parent=27 // pred_fallthru
        _
    $region28: #{positional_encoding.1} parent=5 // pred_fallthru
      _
    %p202 = scmp.le.s32.totalorder 2, %s8
    // Predicated region
    $region33: #{positional_encoding.1} parent=5 // pred_check
      %p203 = pneg %p202
    $region34: #{positional_encoding.1} parent=5 // pred_check_branch
      %205 = sbr.rel (%p203) target = $region36
    $region35: #{positional_encoding.1} parent=5 // pred_region
      %s206 = ssub.s32 %s8, 2
      // Predicated region
      $region37: #{positional_encoding.1} parent=35 // pred_check
        %p207 = pneg %p105
      $region38: #{positional_encoding.1} parent=35 // pred_check_branch
        %209 = sbr.rel (%p207) target = $region40
      $region39: #{positional_encoding.1} parent=35 // pred_region
        %p210 = scmp.lt.s32.totalorder %s20, 1
        %s211 = scalar_select %p210, %s20, 1
        %p212 = scmp.lt.s32.totalorder %s19, 0
        %s213 = scalar_select %p212, %s19, 0
        %s214 = sadd.s32 %s213, %s211
        %s215 = smul.addr %s214, 8
        %s216 = scalar_lea.vmem %s2, %s215
      $region40: #{positional_encoding.1} parent=35 // pred_fallthru
        _
    $region36: #{positional_encoding.1} parent=5 // pred_fallthru
      _
  $region6: #{positional_encoding.1} parent=0 // loop_footer
    %s12 = sadd.s32 1, %s8
  $region7: #{positional_encoding.1} parent=0 // loop_footer_branch
    %7 = sbr.rel target = $region3
  $region8: #{positional_encoding.1} parent=0 // loop_exit
    _

</llo_original>
